<compile_context>
chip_gen: v7x
topology: tpu7x:2x2x1
jax: 0.10.0
libtpu: 0.0.40
codegen_flags: <defaults>
</compile_context>

<pallas_src>
import math

import jax
import jax.numpy as jnp
from jax.experimental import pallas as pl
from jax.experimental.pallas import tpu as pltpu

_LANE = 128


def _build_pe(d_model: int, height: int, width: int) -> jnp.ndarray:
    """Deterministic positional-encoding buffer, identical to the PyTorch __init__."""
    # The PyTorch module itself requires even d_model (pe[1::2] vs ceil(d/2) cos rows).
    assert d_model % 2 == 0, "PositionalEncoding requires an even d_model"
    y_pos = jnp.tile(jnp.arange(height, dtype=jnp.float32)[:, None], (1, width))
    x_pos = jnp.tile(jnp.arange(width, dtype=jnp.float32)[None, :], (height, 1))
    div_term = jnp.exp(
        jnp.arange(0, d_model, 2, dtype=jnp.float32) * -(math.log(10000.0) / d_model)
    )
    pe_even = jnp.sin(x_pos[None, :, :] * div_term[:, None, None])  # channels 0,2,4,...
    pe_odd = jnp.cos(y_pos[None, :, :] * div_term[:, None, None])   # channels 1,3,5,...
    pe = jnp.zeros((d_model, height, width), dtype=jnp.float32)
    pe = pe.at[0::2, :, :].set(pe_even)
    pe = pe.at[1::2, :, :].set(pe_odd)
    return pe


def _add_pe_kernel(x_ref, pe_ref, o_ref):
    # x_ref / o_ref: (B, TN) lane-dense tile;  pe_ref: (1, TN).
    # (1, TN) + (B, TN) broadcasts along the sublane axis — a plain VPU add.
    o_ref[...] = x_ref[...] + pe_ref[...]


def _choose_tn(n: int, b: int, dtype_bytes: int) -> int:
    """Lane-dense tile width along the flattened feature axis."""
    if n % _LANE != 0:
        # Full-extent block is always legal w.r.t. the (8,128) tiling rule.
        return n
    # Cap each x tile at ~4 MiB: with double-buffered input + double-buffered
    # output + the pe tile this stays comfortably under v7x's 32 MiB scoped
    # VMEM default (and far under v5e/v6e's 128 MiB).
    max_row_elems = max(_LANE, (4 * 1024 * 1024 // dtype_bytes) // max(b, 1))
    tn = n
    # Prefer >= 2 grid steps so v7x's two TensorCores both get work.
    if (n // 2) % _LANE == 0:
        tn = n // 2
    # Halve further only while over the VMEM cap (keep tiles as big as possible:
    # per-step overhead amortization dominates for this mem-bound kernel).
    while tn > max_row_elems and (tn // 2) % _LANE == 0 and n % (tn // 2) == 0:
        tn //= 2
    return tn


def positional_encoding_forward(x: jnp.ndarray, pe: jnp.ndarray) -> jnp.ndarray:
    """x: (B, C, H, W);  pe: (C, H, W)  ->  (B, C, H, W)  computing x + pe[None]."""
    B, C, H, W = x.shape
    assert pe.shape == (C, H, W)
    n = C * H * W

    # Lane-dense 2D views (wrapper-side reshape is layout plumbing, not compute).
    x2 = x.reshape(B, n)
    pe2 = pe.reshape(1, n).astype(x.dtype)

    tn = _choose_tn(n, B, jnp.dtype(x.dtype).itemsize)
    assert n % tn == 0
    grid = (n // tn,)

    grid_spec = pltpu.PrefetchScalarGridSpec(
        num_scalar_prefetch=0,
        grid=grid,
        in_specs=[
            # Whole batch + one lane-dense feature chunk per grid step.
            pl.BlockSpec((B, tn), lambda j: (0, j)),
            # pe tile depends only on the grid step -> fetched once per step.
            pl.BlockSpec((1, tn), lambda j: (0, j)),
        ],
        out_specs=pl.BlockSpec((B, tn), lambda j: (0, j)),
    )

    out2 = pl.pallas_call(
        _add_pe_kernel,
        out_shape=jax.ShapeDtypeStruct((B, n), x.dtype),
        grid_spec=grid_spec,
        compiler_params=pltpu.CompilerParams(
            dimension_semantics=("parallel",),
        ),
    )(x2, pe2)

    return out2.reshape(B, C, H, W)


if __name__ == "__main__":
    # Small shapes consistent with the module: d_model=4, height=16, width=16, batch=2.
    B, d_model, height, width = 2, 4, 16, 16

    key = jax.random.PRNGKey(0)
    x = jax.random.normal(key, (B, d_model, height, width), dtype=jnp.float32)

    pe = _build_pe(d_model, height, width)

    out = positional_encoding_forward(x, pe)
    out = jax.block_until_ready(out)

    # Sanity check against the pure-JAX reference of the PyTorch forward.
    ref = x + pe[None, :, :, :]
    assert out.shape == (B, d_model, height, width)
    assert jnp.allclose(out, ref, atol=1e-6, rtol=1e-6)

    print("KERNEL_OK")
</pallas_src>

<mosaic_0001>
module attributes {stable_mosaic.version = 11 : i64} {
  func.func @_add_pe_kernel(%arg0: i32, %arg1: memref<2x512xf32, #tpu.memory_space<vmem>>, %arg2: memref<1x512xf32, #tpu.memory_space<vmem>>, %arg3: memref<2x512xf32, #tpu.memory_space<vmem>>) attributes {dimension_semantics = [#tpu.dimension_semantics<parallel>], iteration_bounds = array<i64: 2>, scalar_prefetch = 0 : i64, scratch_operands = 0 : i64, tpu.core_type = #tpu.core_type<tc>, window_params = [{transform_indices = @transform_0, window_bounds = array<i64: 2, 512>}, {transform_indices = @transform_1, window_bounds = array<i64: 1, 512>}, {transform_indices = @transform_2, window_bounds = array<i64: 2, 512>}]} {
    %c0 = arith.constant 0 : index
    %c0_0 = arith.constant 0 : index
    %0 = vector.load %arg1[%c0, %c0_0] : memref<2x512xf32, #tpu.memory_space<vmem>>, vector<2x512xf32>
    %c0_1 = arith.constant 0 : index
    %c0_2 = arith.constant 0 : index
    %1 = vector.load %arg2[%c0_1, %c0_2] : memref<1x512xf32, #tpu.memory_space<vmem>>, vector<1x512xf32>
    %2 = vector.broadcast %1 : vector<1x512xf32> to vector<2x512xf32>
    %3 = arith.addf %0, %2 : vector<2x512xf32>
    %c0_3 = arith.constant 0 : index
    %c0_4 = arith.constant 0 : index
    %4 = vector.load %arg3[%c0_3, %c0_4] : memref<2x512xf32, #tpu.memory_space<vmem>>, vector<2x512xf32>
    tpu.vector_store %arg3[%c0_3, %c0_4], %3 {strides = array<i32>} : memref<2x512xf32, #tpu.memory_space<vmem>>, vector<2x512xf32>,
    return
  }
  func.func @transform_0(%arg0: i32) -> (i32, i32) {
    %c0_i32 = arith.constant 0 : i32
    %c0_i32_0 = arith.constant 0 : i32
    return %c0_i32, %arg0 : i32, i32
  }
  func.func @transform_1(%arg0: i32) -> (i32, i32) {
    %c0_i32 = arith.constant 0 : i32
    %c0_i32_0 = arith.constant 0 : i32
    return %c0_i32, %arg0 : i32, i32
  }
  func.func @transform_2(%arg0: i32) -> (i32, i32) {
    %c0_i32 = arith.constant 0 : i32
    %c0_i32_0 = arith.constant 0 : i32
    return %c0_i32, %arg0 : i32, i32
  }
}

</mosaic_0001>

<llo_original>
// kernel: tpu_custom_call.1
$region0: #{tpu_custom_call.1}
  #allocation0 [shape = 'u32[]', space=smem, size = 0x4, offset = 0x4, fixed_abs, tag = 'smem constant byte address 0x4 - core index']
  #allocation1 [shape = 'u32[144,128]{1,0:T(1,128)}', space=vmem, size = 0x12000, scoped, tag = 'internal scratch']
  %s0 = inlined_call_operand.hbm [shape: f32[2,1024], index: 0, kind: input, shape index: {}]
  %s1 = inlined_call_operand.hbm [shape: f32[1,1024], index: 1, kind: input, shape index: {}]
  %s2 = inlined_call_operand.hbm [shape: f32[2,1024], index: 2, kind: output, shape index: {}]
  %s3 = sld [smem:[#allocation0]]
  $region49: #{tpu_custom_call.1} parent=0
    _
  %s5 = ssub.s32 1, %s3
  %s6 = scalar_select 0, %s5, %s3
  $region1: #{tpu_custom_call.1} parent=0
    #allocation2 [shape = 'u8[8192]{0}', space=vmem, size = 0x2000, scoped, tag = 'input window, operand 0']
    #allocation3 [shape = 's32[2]{0}', space=sflag, size = 0x8, scoped, tag = 'scoped memory for tpu_custom_call.1']
    #allocation4 [shape = 's32[2]{0}', space=sflag, size = 0x8, scoped, tag = 'scoped memory for tpu_custom_call.1']
    #allocation5 [shape = 'u8[4096]{0}', space=vmem, size = 0x1000, scoped, tag = 'input window, operand 1']
    #allocation6 [shape = 's32[2]{0}', space=sflag, size = 0x8, scoped, tag = 'scoped memory for tpu_custom_call.1']
    #allocation7 [shape = 'u8[8192]{0}', space=vmem, size = 0x2000, scoped, tag = 'output window, operand 0']
    %7 = vsyncpa [#allocation3], 0
    %s8 = scalar_lea.sflag [#allocation3], 1
    %9 = vsyncpa %s8, 0
    %10 = vsyncpa [#allocation6], 0
    %s11 = scalar_lea.sflag [#allocation6], 1
    %12 = vsyncpa %s11, 0
    %13 = vsyncpa [#allocation4], 0
    %s14 = scalar_lea.sflag [#allocation4], 1
    %15 = vsyncpa %s14, 0
    loop: start=0, step=1, limit=4
    $region2: #{tpu_custom_call.1} parent=1 // loop_pre_header
      _
    $region3: #{tpu_custom_call.1} parent=1 // loop_header
      %s17 = sphi 0, %s21
      %p18 = scmp.ge.s32.totalorder %s17, 4
      %s27 = sphi 0, %s29
      %s30 = sphi 0, %s27
      %s31 = sphi 0, %s30
      %s47 = sphi 0, %s31
      %s53 = sphi 0, %s55
      %s56 = sphi 0, %s53
      %s57 = sphi 0, %s56
      %s73 = sphi 0, %s57
      %s79 = sphi 0, %s81
      %s82 = sphi 0, %s79
      %s83 = sphi 0, %s82
      %s99 = sphi 0, %s83
    $region4: #{tpu_custom_call.1} parent=1 // loop_header_branch
      %20 = sbr.rel (%p18) target = $region8
    $region5: #{tpu_custom_call.1} parent=1 // loop_body
      %s22 = ssub.s32 %s17, 1
      %s23 = ssub.s32 %s17, 2
      %s24 = sadd.s32 %s17, 1
      %s25 = ssub.s32 %s17, %s24
      %p26 = scmp.eq.s32.totalorder %s25, 0
      %s28 = sadd.s32 %s27, 1
      %s29 = scalar_select %p26, %s27, %s28
      %p32 = pneg %p26
      %p33 = scmp.eq.s32.totalorder %s17, 1
      %p34 = por %p32, %p33
      %p35 = scmp.ne.s32.totalorder %s27, %s30
      %p36 = scmp.eq.s32.totalorder %s17, 0
      %p37 = por %p35, %p36
      %p38 = scmp.ne.s32.totalorder %s27, %s30
      %p39 = scmp.eq.s32.totalorder %s22, 1
      %p40 = por %p38, %p39
      %p41 = scmp.ne.s32.totalorder %s30, %s31
      %p42 = scmp.eq.s32.totalorder %s22, 0
      %p43 = por %p41, %p42
      %p44 = scmp.ne.s32.totalorder %s30, %s31
      %p45 = scmp.eq.s32.totalorder %s23, 1
      %p46 = por %p44, %p45
      %p48 = scmp.ne.s32.totalorder %s31, %s47
      %p49 = scmp.eq.s32.totalorder %s23, 0
      %p50 = por %p48, %p49
      %s51 = ssub.s32 %s17, %s24
      %p52 = scmp.eq.s32.totalorder %s51, 0
      %s54 = sadd.s32 %s53, 1
      %s55 = scalar_select %p52, %s53, %s54
      %p58 = pneg %p52
      %p59 = scmp.eq.s32.totalorder %s17, 1
      %p60 = por %p58, %p59
      %p61 = scmp.ne.s32.totalorder %s53, %s56
      %p62 = scmp.eq.s32.totalorder %s17, 0
      %p63 = por %p61, %p62
      %p64 = scmp.ne.s32.totalorder %s53, %s56
      %p65 = scmp.eq.s32.totalorder %s22, 1
      %p66 = por %p64, %p65
      %p67 = scmp.ne.s32.totalorder %s56, %s57
      %p68 = scmp.eq.s32.totalorder %s22, 0
      %p69 = por %p67, %p68
      %p70 = scmp.ne.s32.totalorder %s56, %s57
      %p71 = scmp.eq.s32.totalorder %s23, 1
      %p72 = por %p70, %p71
      %p74 = scmp.ne.s32.totalorder %s57, %s73
      %p75 = scmp.eq.s32.totalorder %s23, 0
      %p76 = por %p74, %p75
      %s77 = ssub.s32 %s17, %s24
      %p78 = scmp.eq.s32.totalorder %s77, 0
      %s80 = sadd.s32 %s79, 1
      %s81 = scalar_select %p78, %s79, %s80
      %p84 = pneg %p78
      %p85 = scmp.eq.s32.totalorder %s17, 1
      %p86 = por %p84, %p85
      %p87 = scmp.ne.s32.totalorder %s79, %s82
      %p88 = scmp.eq.s32.totalorder %s17, 0
      %p89 = por %p87, %p88
      %p90 = scmp.ne.s32.totalorder %s79, %s82
      %p91 = scmp.eq.s32.totalorder %s22, 1
      %p92 = por %p90, %p91
      %p93 = scmp.ne.s32.totalorder %s82, %s83
      %p94 = scmp.eq.s32.totalorder %s22, 0
      %p95 = por %p93, %p94
      %p96 = scmp.ne.s32.totalorder %s82, %s83
      %p97 = scmp.eq.s32.totalorder %s23, 1
      %p98 = por %p96, %p97
      %p100 = scmp.ne.s32.totalorder %s83, %s99
      %p101 = scmp.eq.s32.totalorder %s23, 0
      %p102 = por %p100, %p101
      %p103 = scmp.le.s32.totalorder 1, %s17
      %p104 = scmp.lt.s32.totalorder %s17, 3
      %p105 = pnand %p103, %p104
      %p106 = pneg %p105
      // Predicated region
      $region9: #{tpu_custom_call.1} parent=5 // pred_check
        _
      $region10: #{tpu_custom_call.1} parent=5 // pred_check_branch
        %108 = sbr.rel (%p105) target = $region12
      $region11: #{tpu_custom_call.1} parent=5 // pred_region
        %s109 = ssub.s32 %s17, 1
      $region12: #{tpu_custom_call.1} parent=5 // pred_fallthru
        _
      %p110 = scmp.lt.s32.totalorder %s17, 2
      // Predicated region
      $region13: #{tpu_custom_call.1} parent=5 // pred_check
        %p111 = pneg %p110
      $region14: #{tpu_custom_call.1} parent=5 // pred_check_branch
        %113 = sbr.rel (%p111) target = $region16
      $region15: #{tpu_custom_call.1} parent=5 // pred_region
        // Predicated region
        $region17: #{tpu_custom_call.1} parent=15 // pred_check
          %p114 = pneg %p37
        $region18: #{tpu_custom_call.1} parent=15 // pred_check_branch
          %116 = sbr.rel (%p114) target = $region20
        $region19: #{tpu_custom_call.1} parent=15 // pred_region
          %s117 = sand.u32 %s27, 1
          %s118 = scalar_lea.sflag [#allocation3], %s117
          %s119 = sand.u32 %s27, 1
          %s120 = smul.addr %s119, 8
          %s121 = scalar_lea.vmem [#allocation2], %s120
          %s122 = smul.u32 4, %s17
          %s124 = ssub.s32 128, 128
          %125 = vsyncadd %s118, %s124
          %s126 = smul.addr %s122, 32
          %s127 = scalar_lea.hbm %s0, %s126
          %s129 = sshll.u32 %s121, 4
          %s130 = int_to_ptr.vmem [resolvable:$true] %s129
          %132 = dma.hbm_to_vmem [thread:$0]  %s127, 128, %s130, %s118
        $region20: #{tpu_custom_call.1} parent=15 // pred_fallthru
          _
        // Predicated region
        $region21: #{tpu_custom_call.1} parent=15 // pred_check
          %p133 = pneg %p63
        $region22: #{tpu_custom_call.1} parent=15 // pred_check_branch
          %135 = sbr.rel (%p133) target = $region24
        $region23: #{tpu_custom_call.1} parent=15 // pred_region
          %s136 = sand.u32 %s53, 1
          %s137 = scalar_lea.sflag [#allocation6], %s136
          %s138 = sand.u32 %s53, 1
          %s139 = smul.addr %s138, 4
          %s140 = scalar_lea.vmem [#allocation5], %s139
          %s141 = smul.u32 4, %s17
          %s143 = ssub.s32 64, 64
          %144 = vsyncadd %s137, %s143
          %s145 = smul.addr %s141, 16
          %s146 = scalar_lea.hbm %s1, %s145
          %s148 = sshll.u32 %s140, 4
          %s149 = int_to_ptr.vmem [resolvable:$true] %s148
          %151 = dma.hbm_to_vmem [thread:$0]  %s146, 64, %s149, %s137
        $region24: #{tpu_custom_call.1} parent=15 // pred_fallthru
          _
      $region16: #{tpu_custom_call.1} parent=5 // pred_fallthru
        _
      %p152 = scmp.le.s32.totalorder 1, %s17
      %p153 = scmp.lt.s32.totalorder %s17, 3
      %p154 = pnand %p152, %p153
      %p155 = pneg %p154
      // Predicated region
      $region25: #{tpu_custom_call.1} parent=5 // pred_check
        _
      $region26: #{tpu_custom_call.1} parent=5 // pred_check_branch
        %157 = sbr.rel (%p154) target = $region28
      $region27: #{tpu_custom_call.1} parent=5 // pred_region
        %s158 = ssub.s32 %s17, 1
        %s159 = sand.u32 %s30, 1
        %s160 = scalar_lea.sflag [#allocation3], %s159
        %s161 = sand.u32 %s30, 1
        %s162 = smul.addr %s161, 8
        %s163 = scalar_lea.vmem [#allocation2], %s162
        // Predicated region
        $region29: #{tpu_custom_call.1} parent=27 // pred_check
          %p164 = pneg %p43
        $region30: #{tpu_custom_call.1} parent=27 // pred_check_branch
          %166 = sbr.rel (%p164) target = $region32
        $region31: #{tpu_custom_call.1} parent=27 // pred_region
          %167 = dma.done %s160, 128
        $region32: #{tpu_custom_call.1} parent=27 // pred_fallthru
          _
        %s168 = sand.u32 %s56, 1
        %s169 = scalar_lea.sflag [#allocation6], %s168
        %s170 = sand.u32 %s56, 1
        %s171 = smul.addr %s170, 4
        %s172 = scalar_lea.vmem [#allocation5], %s171
        // Predicated region
        $region33: #{tpu_custom_call.1} parent=27 // pred_check
          %p173 = pneg %p69
        $region34: #{tpu_custom_call.1} parent=27 // pred_check_branch
          %175 = sbr.rel (%p173) target = $region36
        $region35: #{tpu_custom_call.1} parent=27 // pred_region
          %176 = dma.done %s169, 64
        $region36: #{tpu_custom_call.1} parent=27 // pred_fallthru
          _
        %s177 = sand.u32 %s30, 1
        %s178 = scalar_lea.sflag [#allocation3], %s177
        %s179 = sand.u32 %s30, 1
        %s180 = smul.addr %s179, 8
        %s181 = scalar_lea.vmem [#allocation2], %s180
        %p182 = pneg %p43
        %p183 = pneg %p40
        %s184 = sand.u32 %s56, 1
        %s185 = scalar_lea.sflag [#allocation6], %s184
        %s186 = sand.u32 %s56, 1
        %s187 = smul.addr %s186, 4
        %s188 = scalar_lea.vmem [#allocation5], %s187
        %p189 = pneg %p69
        %p190 = pneg %p66
        %p191 = pneg %p95
        %p192 = pneg %p92
        %s193 = sand.u32 %s82, 1
        %s194 = scalar_lea.sflag [#allocation4], %s193
        %s195 = sand.u32 %s82, 1
        %s196 = smul.addr %s195, 8
        %s197 = scalar_lea.vmem [#allocation7], %s196
        %s198 = smul.u32 4, %s22
        %s199 = smul.u32 4, %s22
        %s200 = smul.u32 4, %s22
        %v201 = vld [vmem:[%s163] sm:$0xff]
        %v202 = vld [vmem:[%s172] sm:$0xf]
        %v204 = vlaneseq
        %v205 = vshrl.u32 %v204, 7
        %v206 = vsub.s32 0, %v205
        %v207 = vrot.slane %v202, %v206
        %v208 = vlaneseq
        %v209 = vshrl.u32 %v208, 7
        %v210 = vsub.s32 1, %v209
        %v211 = vrot.slane %v202, %v210
        %v212 = vlaneseq
        %v213 = vshrl.u32 %v212, 7
        %v214 = vsub.s32 2, %v213
        %v215 = vrot.slane %v202, %v214
        %v216 = vlaneseq
        %v217 = vshrl.u32 %v216, 7
        %v218 = vsub.s32 3, %v217
        %v219 = vrot.slane %v202, %v218
        %v220 = vcombine.low %v207, %v211
        %v221 = vcombine.low %v215, %v219
        %v223 = vunpack.c.l.s4 1983009808
        %v224 = vunpack.c.0.s8 %v223
        %v225 = vlaneseq
        %v226 = vshrl.u32 %v225, 7
        %v227 = vsub.s32 %v224, %v226
        %v228 = vrot.slane %v220, %v227
        %v230 = vunpack.c.l.s4 1983009808
        %v231 = vunpack.c.0.s8 %v230
        %v232 = vlaneseq
        %v233 = vshrl.u32 %v232, 7
        %v234 = vsub.s32 %v231, %v233
        %v235 = vrot.slane %v221, %v234
        %v236 = vcombine.low %v228, %v235
        %v238 = vadd.f32 %v201, %v236
        %239 = vst [vmem:[%s197] sm:$0xff] %v238
        %s240 = sand.u32 %s82, 1
        %s241 = scalar_lea.sflag [#allocation4], %s240
        %s242 = sand.u32 %s82, 1
        %s243 = smul.addr %s242, 8
        %s244 = scalar_lea.vmem [#allocation7], %s243
        // Predicated region
        $region37: #{tpu_custom_call.1} parent=27 // pred_check
          %p245 = pneg %p92
        $region38: #{tpu_custom_call.1} parent=27 // pred_check_branch
          %247 = sbr.rel (%p245) target = $region40
        $region39: #{tpu_custom_call.1} parent=27 // pred_region
          %s248 = smul.u32 4, %s22
          %s250 = ssub.s32 128, 128
          %251 = vsyncadd %s241, %s250
          %s252 = smul.addr %s248, 32
          %s253 = scalar_lea.hbm %s2, %s252
          %s255 = sshll.u32 %s244, 4
          %s256 = int_to_ptr.vmem [resolvable:$true] %s255
          %258 = dma.vmem_to_hbm [thread:$0]  %s256, 128, %s253, %s241
        $region40: #{tpu_custom_call.1} parent=27 // pred_fallthru
          _
      $region28: #{tpu_custom_call.1} parent=5 // pred_fallthru
        _
      %p259 = scmp.le.s32.totalorder 2, %s17
      // Predicated region
      $region41: #{tpu_custom_call.1} parent=5 // pred_check
        %p260 = pneg %p259
      $region42: #{tpu_custom_call.1} parent=5 // pred_check_branch
        %262 = sbr.rel (%p260) target = $region44
      $region43: #{tpu_custom_call.1} parent=5 // pred_region
        %s263 = ssub.s32 %s17, 2
        // Predicated region
        $region45: #{tpu_custom_call.1} parent=43 // pred_check
          %p264 = pneg %p98
        $region46: #{tpu_custom_call.1} parent=43 // pred_check_branch
          %266 = sbr.rel (%p264) target = $region48
        $region47: #{tpu_custom_call.1} parent=43 // pred_region
          %s267 = sand.u32 %s83, 1
          %s268 = scalar_lea.sflag [#allocation4], %s267
          %s269 = sand.u32 %s83, 1
          %s270 = smul.addr %s269, 8
          %s271 = scalar_lea.vmem [#allocation7], %s270
          %272 = dma.done %s268, 128
        $region48: #{tpu_custom_call.1} parent=43 // pred_fallthru
          _
      $region44: #{tpu_custom_call.1} parent=5 // pred_fallthru
        _
    $region6: #{tpu_custom_call.1} parent=1 // loop_footer
      %s21 = sadd.s32 1, %s17
    $region7: #{tpu_custom_call.1} parent=1 // loop_footer_branch
      %16 = sbr.rel target = $region3
    $region8: #{tpu_custom_call.1} parent=1 // loop_exit
      _
    %273 = vsyncpa [#allocation3], 1
    %s274 = scalar_lea.sflag [#allocation3], 1
    %275 = vsyncpa %s274, 1
    %276 = vsyncpa [#allocation6], 1
    %s277 = scalar_lea.sflag [#allocation6], 1
    %278 = vsyncpa %s277, 1
    %279 = vsyncpa [#allocation4], 1
    %s280 = scalar_lea.sflag [#allocation4], 1
    %281 = vsyncpa %s280, 1

</llo_original>
